<compile_context>
chip_gen: v7x
topology: tpu7x:2x2x1
jax: 0.10.0
libtpu: 0.0.40
codegen_flags: <defaults>
</compile_context>

<pallas_src>
import jax
import jax.numpy as jnp
from jax.experimental import pallas as pl
from jax.experimental.pallas import tpu as pltpu


def _round_up(n, m):
    return ((n + m - 1) // m) * m


def _mlp_kernel(x_ref, w1_ref, w2_ref, w3_ref, b_ref, o_ref):
    # Feature-major: transpose the x tile once, then the batch dim (TB) rides
    # the 128-lane axis for every matmul / bias / ReLU / store.
    xt = x_ref[...].T                       # (F, TB) f32
    b = b_ref[...]                          # (50, 1) f32: [b1 | b2 | b3]

    # Layer 1: (32, F) @ (F, TB) + b1, ReLU   (f32 accumulation on the MXU)
    h1 = jnp.dot(w1_ref[...], xt, preferred_element_type=jnp.float32)
    h1 = jnp.maximum(h1 + b[0:32], 0.0)
    # Dropout(0.2) -> identity in eval mode.

    # Layer 2: (16, 32) @ (32, TB) + b2, ReLU
    h2 = jnp.dot(w2_ref[...], h1, preferred_element_type=jnp.float32)
    h2 = jnp.maximum(h2 + b[32:48], 0.0)
    # Dropout(0.2) -> identity in eval mode.

    # Layer 3: (2, 16) @ (16, TB) + b3 — stored lane-dense as (2, TB)
    out = jnp.dot(w3_ref[...], h2, preferred_element_type=jnp.float32)
    o_ref[...] = (out + b[48:50]).astype(o_ref.dtype)


def _choose_tile(B, block_b):
    """Batch tile: exact for small B; otherwise big, 128-aligned, >=2 grid steps."""
    if B <= 256:
        return B                            # single full block, no masking needed
    return min(block_b, _round_up(-(-B // 2), 128))


def heart_disease_nn_forward(x, params, *, block_b=4096):
    """x: (B, input_size) float32. params: (in, out) weights, (1, out) biases."""
    x = x.astype(jnp.float32)
    B, F = x.shape

    tb = _choose_tile(B, block_b)
    grid = (pl.cdiv(B, tb),)

    # Pre-transpose the (tiny) weights once; fuse the three biases into (50, 1).
    w1t = params["w1"].T.astype(jnp.float32)     # (32, F)
    w2t = params["w2"].T.astype(jnp.float32)     # (16, 32)
    w3t = params["w3"].T.astype(jnp.float32)     # (2, 16)
    b_all = jnp.concatenate(
        [params["b1"], params["b2"], params["b3"]], axis=1
    ).astype(jnp.float32).T                      # (50, 1)

    wt_elems = F * 32 + 32 * 16 + 16 * 2
    flops = 2 * B * wt_elems
    bytes_accessed = (
        B * F * 4          # f32 x stream
        + B * 2 * 4        # f32 output (lane-dense (2, B))
        + wt_elems * 4     # resident weights
        + 50 * 4           # fused biases
    )

    out_t = pl.pallas_call(
        _mlp_kernel,
        out_shape=jax.ShapeDtypeStruct((2, B), jnp.float32),
        grid=grid,
        in_specs=[
            pl.BlockSpec((tb, F), lambda i: (i, 0)),         # x: tiled over batch
            pl.BlockSpec(w1t.shape, lambda i: (0, 0)),       # weights: resident
            pl.BlockSpec(w2t.shape, lambda i: (0, 0)),
            pl.BlockSpec(w3t.shape, lambda i: (0, 0)),
            pl.BlockSpec(b_all.shape, lambda i: (0, 0)),     # fused biases: resident
        ],
        out_specs=pl.BlockSpec((2, tb), lambda i: (0, i)),   # lane-dense output
        compiler_params=pltpu.CompilerParams(
            dimension_semantics=("parallel",),
        ),
        cost_estimate=pl.CostEstimate(
            flops=flops, transcendentals=0, bytes_accessed=bytes_accessed
        ),
    )(x, w1t, w2t, w3t, b_all)

    return out_t.T                                           # (B, 2)


def init_params(key, input_size):
    """Deterministic init mimicking nn.Linear's U(-1/sqrt(fan_in), 1/sqrt(fan_in))."""
    def linear(key, fan_in, fan_out):
        kw, kb = jax.random.split(key)
        bound = 1.0 / jnp.sqrt(jnp.float32(fan_in))
        # stored as (in, out) so the math is x @ W
        w = jax.random.uniform(kw, (fan_in, fan_out), jnp.float32, -bound, bound)
        b = jax.random.uniform(kb, (1, fan_out), jnp.float32, -bound, bound)
        return w, b

    k1, k2, k3 = jax.random.split(key, 3)
    w1, b1 = linear(k1, input_size, 32)
    w2, b2 = linear(k2, 32, 16)
    w3, b3 = linear(k3, 16, 2)
    return {"w1": w1, "b1": b1, "w2": w2, "b2": b2, "w3": w3, "b3": b3}


def reference_forward(x, params):
    """Pure-JAX f32 reference (dropout = identity in eval mode)."""
    h1 = jnp.maximum(x @ params["w1"] + params["b1"], 0.0)
    h2 = jnp.maximum(h1 @ params["w2"] + params["b2"], 0.0)
    return h2 @ params["w3"] + params["b3"]


if __name__ == "__main__":
    key = jax.random.PRNGKey(0)
    k_param, k_x = jax.random.split(key)

    input_size = 13   # classic heart-disease feature count
    batch = 8

    params = init_params(k_param, input_size)
    x = jax.random.normal(k_x, (batch, input_size), jnp.float32)

    out = heart_disease_nn_forward(x, params)
    out = jax.block_until_ready(out)

    ref = reference_forward(x, params)
    assert out.shape == (batch, 2)
    assert jnp.allclose(out, ref, atol=5e-2, rtol=5e-2), (
        f"max abs err {jnp.max(jnp.abs(out - ref))}")

    # Exercise the multi-block + partial-final-block path as well.
    x_big = jax.random.normal(jax.random.PRNGKey(1), (300, input_size), jnp.float32)
    out_big = jax.block_until_ready(heart_disease_nn_forward(x_big, params))
    ref_big = reference_forward(x_big, params)
    assert out_big.shape == (300, 2)
    assert jnp.allclose(out_big, ref_big, atol=5e-2, rtol=5e-2), (
        f"max abs err {jnp.max(jnp.abs(out_big - ref_big))}")

    print("KERNEL_OK")
</pallas_src>

<mosaic_0001>
module attributes {stable_mosaic.version = 11 : i64} {
  func.func @_mlp_kernel(%arg0: i32, %arg1: memref<8x13xf32, #tpu.memory_space<vmem>>, %arg2: memref<32x13xf32, #tpu.memory_space<vmem>>, %arg3: memref<16x32xf32, #tpu.memory_space<vmem>>, %arg4: memref<2x16xf32, #tpu.memory_space<vmem>>, %arg5: memref<50x1xf32, #tpu.memory_space<vmem>>, %arg6: memref<2x8xf32, #tpu.memory_space<vmem>>) attributes {dimension_semantics = [#tpu.dimension_semantics<parallel>], iteration_bounds = array<i64: 1>, scalar_prefetch = 0 : i64, scratch_operands = 0 : i64, tpu.core_type = #tpu.core_type<tc>, window_params = [{transform_indices = @transform_0, window_bounds = array<i64: 8, 13>}, {pipeline_mode = #tpu.pipeline_mode<synchronous>, transform_indices = @transform_1, window_bounds = array<i64: 32, 13>}, {pipeline_mode = #tpu.pipeline_mode<synchronous>, transform_indices = @transform_2, window_bounds = array<i64: 16, 32>}, {pipeline_mode = #tpu.pipeline_mode<synchronous>, transform_indices = @transform_3, window_bounds = array<i64: 2, 16>}, {pipeline_mode = #tpu.pipeline_mode<synchronous>, transform_indices = @transform_4, window_bounds = array<i64: 50, 1>}, {transform_indices = @transform_5, window_bounds = array<i64: 2, 8>}]} {
    %c0 = arith.constant 0 : index
    %c0_0 = arith.constant 0 : index
    %0 = vector.load %arg1[%c0, %c0_0] : memref<8x13xf32, #tpu.memory_space<vmem>>, vector<8x13xf32>
    %1 = tpu.transpose %0, [1, 0] : vector<8x13xf32> -> vector<13x8xf32>
    %c0_1 = arith.constant 0 : index
    %c0_2 = arith.constant 0 : index
    %2 = vector.load %arg5[%c0_1, %c0_2] : memref<50x1xf32, #tpu.memory_space<vmem>>, vector<50x1xf32>
    %c0_3 = arith.constant 0 : index
    %c0_4 = arith.constant 0 : index
    %3 = vector.load %arg2[%c0_3, %c0_4] : memref<32x13xf32, #tpu.memory_space<vmem>>, vector<32x13xf32>
    %cst = arith.constant dense<0.000000e+00> : vector<32x8xf32>
    %4 = tpu.matmul %3, %1, %cst {dimension_numbers = #tpu.dot_dimension_numbers<[1], [0], [0], [1], [0, 0, 1, 1], [], []>} : vector<32x13xf32>, vector<13x8xf32>, vector<32x8xf32> -> vector<32x8xf32>
    %5 = vector.extract_strided_slice %2 {offsets = [0, 0], sizes = [32, 1], strides = [1, 1]} : vector<50x1xf32> to vector<32x1xf32>
    %6 = vector.broadcast %5 : vector<32x1xf32> to vector<32x8xf32>
    %7 = arith.addf %4, %6 : vector<32x8xf32>
    %cst_5 = arith.constant 0.000000e+00 : f32
    %8 = vector.broadcast %cst_5 : f32 to vector<32x8xf32>
    %9 = arith.maximumf %7, %8 : vector<32x8xf32>
    %c0_6 = arith.constant 0 : index
    %c0_7 = arith.constant 0 : index
    %10 = vector.load %arg3[%c0_6, %c0_7] : memref<16x32xf32, #tpu.memory_space<vmem>>, vector<16x32xf32>
    %cst_8 = arith.constant dense<0.000000e+00> : vector<16x8xf32>
    %11 = tpu.matmul %10, %9, %cst_8 {dimension_numbers = #tpu.dot_dimension_numbers<[1], [0], [0], [1], [0, 0, 1, 1], [], []>} : vector<16x32xf32>, vector<32x8xf32>, vector<16x8xf32> -> vector<16x8xf32>
    %12 = vector.extract_strided_slice %2 {offsets = [32, 0], sizes = [16, 1], strides = [1, 1]} : vector<50x1xf32> to vector<16x1xf32>
    %13 = vector.broadcast %12 : vector<16x1xf32> to vector<16x8xf32>
    %14 = arith.addf %11, %13 : vector<16x8xf32>
    %cst_9 = arith.constant 0.000000e+00 : f32
    %15 = vector.broadcast %cst_9 : f32 to vector<16x8xf32>
    %16 = arith.maximumf %14, %15 : vector<16x8xf32>
    %c0_10 = arith.constant 0 : index
    %c0_11 = arith.constant 0 : index
    %17 = vector.load %arg4[%c0_10, %c0_11] : memref<2x16xf32, #tpu.memory_space<vmem>>, vector<2x16xf32>
    %cst_12 = arith.constant dense<0.000000e+00> : vector<2x8xf32>
    %18 = tpu.matmul %17, %16, %cst_12 {dimension_numbers = #tpu.dot_dimension_numbers<[1], [0], [0], [1], [0, 0, 1, 1], [], []>} : vector<2x16xf32>, vector<16x8xf32>, vector<2x8xf32> -> vector<2x8xf32>
    %19 = vector.extract_strided_slice %2 {offsets = [48, 0], sizes = [2, 1], strides = [1, 1]} : vector<50x1xf32> to vector<2x1xf32>
    %20 = vector.broadcast %19 : vector<2x1xf32> to vector<2x8xf32>
    %21 = arith.addf %18, %20 : vector<2x8xf32>
    %c0_13 = arith.constant 0 : index
    %c0_14 = arith.constant 0 : index
    %22 = vector.load %arg6[%c0_13, %c0_14] : memref<2x8xf32, #tpu.memory_space<vmem>>, vector<2x8xf32>
    tpu.vector_store %arg6[%c0_13, %c0_14], %21 {strides = array<i32>} : memref<2x8xf32, #tpu.memory_space<vmem>>, vector<2x8xf32>,
    return
  }
  func.func @transform_0(%arg0: i32) -> (i32, i32) {
    %c0_i32 = arith.constant 0 : i32
    %c0_i32_0 = arith.constant 0 : i32
    return %arg0, %c0_i32 : i32, i32
  }
  func.func @transform_1(%arg0: i32) -> (i32, i32) {
    %c0_i32 = arith.constant 0 : i32
    %c0_i32_0 = arith.constant 0 : i32
    %c0_i32_1 = arith.constant 0 : i32
    return %c0_i32, %c0_i32_0 : i32, i32
  }
  func.func @transform_2(%arg0: i32) -> (i32, i32) {
    %c0_i32 = arith.constant 0 : i32
    %c0_i32_0 = arith.constant 0 : i32
    %c0_i32_1 = arith.constant 0 : i32
    return %c0_i32, %c0_i32_0 : i32, i32
  }
  func.func @transform_3(%arg0: i32) -> (i32, i32) {
    %c0_i32 = arith.constant 0 : i32
    %c0_i32_0 = arith.constant 0 : i32
    %c0_i32_1 = arith.constant 0 : i32
    return %c0_i32, %c0_i32_0 : i32, i32
  }
  func.func @transform_4(%arg0: i32) -> (i32, i32) {
    %c0_i32 = arith.constant 0 : i32
    %c0_i32_0 = arith.constant 0 : i32
    %c0_i32_1 = arith.constant 0 : i32
    return %c0_i32, %c0_i32_0 : i32, i32
  }
  func.func @transform_5(%arg0: i32) -> (i32, i32) {
    %c0_i32 = arith.constant 0 : i32
    %c0_i32_0 = arith.constant 0 : i32
    return %c0_i32, %arg0 : i32, i32
  }
}

</mosaic_0001>

<llo_original>
// kernel: tpu_custom_call.1
$region0: #{tpu_custom_call.1}
  #allocation0 [shape = 'u32[]', space=smem, size = 0x4, offset = 0x4, fixed_abs, tag = 'smem constant byte address 0x4 - core index']
  #allocation1 [shape = 'u32[144,128]{1,0:T(1,128)}', space=vmem, size = 0x12000, scoped, tag = 'internal scratch']
  %s0 = inlined_call_operand.vmem [shape: f32[8,13], index: 0, kind: input, shape index: {}]
  %s1 = inlined_call_operand.vmem [shape: f32[32,13], index: 1, kind: input, shape index: {}]
  %s2 = inlined_call_operand.vmem [shape: f32[16,32], index: 2, kind: input, shape index: {}]
  %s3 = inlined_call_operand.vmem [shape: f32[2,16], index: 3, kind: input, shape index: {}]
  %s4 = inlined_call_operand.vmem [shape: f32[50,1], index: 4, kind: input, shape index: {}]
  %s5 = inlined_call_operand.hbm [shape: f32[2,8], index: 5, kind: output, shape index: {}]
  %s6 = sld [smem:[#allocation0]]
  $region30: #{tpu_custom_call.1} parent=0
    _
  %s8 = ssub.s32 1, %s6
  %s9 = scalar_select 0, %s8, %s6
  $region1: #{tpu_custom_call.1} parent=0
    #allocation2 [shape = 'u8[1024]{0}', space=vmem, size = 0x400, scoped, tag = 'output window, operand 0, single buffered']
    #allocation3 [shape = 's32[1]{0}', space=sflag, size = 0x4, scoped, tag = 'scoped memory for tpu_custom_call.1']
    %10 = vsyncpa [#allocation3], 0
    // Predicated region
    $region2: #{tpu_custom_call.1} parent=1 // pred_check
      _
    $region3: #{tpu_custom_call.1} parent=1 // pred_check_branch
      %12 = sbr.rel (0) target = $region5
    $region4: #{tpu_custom_call.1} parent=1 // pred_region
      _
    $region5: #{tpu_custom_call.1} parent=1 // pred_fallthru
      _
    // Predicated region
    $region6: #{tpu_custom_call.1} parent=1 // pred_check
      _
    $region7: #{tpu_custom_call.1} parent=1 // pred_check_branch
      %14 = sbr.rel (0) target = $region9
    $region8: #{tpu_custom_call.1} parent=1 // pred_region
      _
    $region9: #{tpu_custom_call.1} parent=1 // pred_fallthru
      _
    // Predicated region
    $region10: #{tpu_custom_call.1} parent=1 // pred_check
      _
    $region11: #{tpu_custom_call.1} parent=1 // pred_check_branch
      %16 = sbr.rel (0) target = $region13
    $region12: #{tpu_custom_call.1} parent=1 // pred_region
      _
    $region13: #{tpu_custom_call.1} parent=1 // pred_fallthru
      _
    // Predicated region
    $region14: #{tpu_custom_call.1} parent=1 // pred_check
      _
    $region15: #{tpu_custom_call.1} parent=1 // pred_check_branch
      %18 = sbr.rel (0) target = $region17
    $region16: #{tpu_custom_call.1} parent=1 // pred_region
      _
    $region17: #{tpu_custom_call.1} parent=1 // pred_fallthru
      _
    // Predicated region
    $region18: #{tpu_custom_call.1} parent=1 // pred_check
      _
    $region19: #{tpu_custom_call.1} parent=1 // pred_check_branch
      %20 = sbr.rel (0) target = $region21
    $region20: #{tpu_custom_call.1} parent=1 // pred_region
      _
    $region21: #{tpu_custom_call.1} parent=1 // pred_fallthru
      _
    %v21 = vld [vmem:[%s0] sm:$0xff]
    %v22 = vld [vmem:[%s4] sm:$0xff]
    %v23 = vld [vmem:[%s4 + $0x8] sm:$0xff]
    %v24 = vld [vmem:[%s4 + $0x10] sm:$0xff]
    %v25 = vld [vmem:[%s4 + $0x18] sm:$0xff]
    %v26 = vld [vmem:[%s4 + $0x20] sm:$0xff]
    %v27 = vld [vmem:[%s4 + $0x28] sm:$0xff]
    %v28 = vld [vmem:[%s4 + $0x30] sm:$0x3]
    %v29 = vld [vmem:[%s1] sm:$0xff]
    %v30 = vld [vmem:[%s1 + $0x8] sm:$0xff]
    %v31 = vld [vmem:[%s1 + $0x10] sm:$0xff]
    %v32 = vld [vmem:[%s1 + $0x18] sm:$0xff]
    %34 = vset.pattern.permute.xlu0 0
    %35 = vperm.xlu0 %34, %v22
    %v36 = vpop.permute.xlu0 %35
    %39 = vset.pattern.permute.xlu0 0
    %40 = vperm.xlu0 %39, %v23
    %v41 = vpop.permute.xlu0 %40
    %44 = vset.pattern.permute.xlu0 0
    %45 = vperm.xlu0 %44, %v24
    %v46 = vpop.permute.xlu0 %45
    %49 = vset.pattern.permute.xlu0 0
    %50 = vperm.xlu0 %49, %v25
    %v51 = vpop.permute.xlu0 %50
    %vm53 = vcmask 105472
    %v55 = vsel %vm53, %v29, 0
    %v58 = vsel %vm53, %v30, 0
    %v61 = vsel %vm53, %v31, 0
    %v64 = vsel %vm53, %v32, 0
    %v67 = vsel %vm53, %v21, 0
    %69 = vmatprep.subr.mxu0 0.0
    %70 = vmatpush1.xpose.msra.mxu0 %v67
    %71 = vmatprep.subr.mxu0 0.0
    %72 = vmatpush1.xpose.msra.mxu0 0.0
    %73 = vmatprep.subr.mxu0 0.0
    %74 = vmatpush1.xpose.msra.mxu0 0.0
    %75 = vmatprep.subr.mxu0 0.0
    %76 = vmatpush1.xpose.msra.mxu0 0.0
    %77 = vmatprep.subr.mxu0 0.0
    %78 = vmatpush1.xpose.msra.mxu0 0.0
    %79 = vmatprep.subr.mxu0 0.0
    %80 = vmatpush1.xpose.msra.mxu0 0.0
    %81 = vmatprep.subr.mxu0 0.0
    %82 = vmatpush1.xpose.msra.mxu0 0.0
    %83 = vmatprep.subr.mxu0 0.0
    %84 = vmatpush1.xpose.msra.mxu0 0.0
    %85 = vmatprep.subr.mxu0 0.0
    %86 = vmatpush1.xpose.msra.mxu0 0.0
    %87 = vmatprep.subr.mxu0 0.0
    %88 = vmatpush1.xpose.msra.mxu0 0.0
    %89 = vmatprep.subr.mxu0 0.0
    %90 = vmatpush1.xpose.msra.mxu0 0.0
    %91 = vmatprep.subr.mxu0 0.0
    %92 = vmatpush1.xpose.msra.mxu0 0.0
    %93 = vmatprep.subr.mxu0 0.0
    %94 = vmatpush1.xpose.msra.mxu0 0.0
    %95 = vmatprep.subr.mxu0 0.0
    %96 = vmatpush1.xpose.msra.mxu0 0.0
    %97 = vmatprep.subr.mxu0 0.0
    %98 = vmatpush1.xpose.msra.mxu0 0.0
    %99 = vmatprep.subr.mxu0 0.0
    %100 = vmatpush1.xpose.msra.mxu0 0.0
    %101 = vmatprep.subr.mxu0 0.0
    %102 = vmatpush1.xpose.msra.mxu0 0.0
    %103 = vmatprep.subr.mxu0 0.0
    %104 = vmatpush1.xpose.msra.mxu0 0.0
    %105 = vmatprep.subr.mxu0 0.0
    %106 = vmatpush1.xpose.msra.mxu0 0.0
    %107 = vmatprep.subr.mxu0 0.0
    %108 = vmatpush1.xpose.msra.mxu0 0.0
    %109 = vmatprep.subr.mxu0 0.0
    %110 = vmatpush1.xpose.msra.mxu0 0.0
    %111 = vmatprep.subr.mxu0 0.0
    %112 = vmatpush1.xpose.msra.mxu0 0.0
    %113 = vmatprep.subr.mxu0 0.0
    %114 = vmatpush1.xpose.msra.mxu0 0.0
    %115 = vmatprep.subr.mxu0 0.0
    %116 = vmatpush1.xpose.msra.mxu0 0.0
    %117 = vmatprep.subr.mxu0 0.0
    %118 = vmatpush1.xpose.msra.mxu0 0.0
    %119 = vmatprep.subr.mxu0 0.0
    %120 = vmatpush1.xpose.msra.mxu0 0.0
    %121 = vmatprep.subr.mxu0 0.0
    %122 = vmatpush1.xpose.msra.mxu0 0.0
    %123 = vmatprep.subr.mxu0 0.0
    %124 = vmatpush1.xpose.msra.mxu0 0.0
    %125 = vmatprep.subr.mxu0 0.0
    %126 = vmatpush1.xpose.msra.mxu0 0.0
    %127 = vmatprep.subr.mxu0 0.0
    %128 = vmatpush1.xpose.msra.mxu0 0.0
    %129 = vmatprep.subr.mxu0 0.0
    %130 = vmatpush1.xpose.msra.mxu0 0.0
    %131 = vmatprep.subr.mxu0 0.0
    %132 = vmatpush1.xpose.msra.mxu0 0.0
    %133 = vmatprep.mubr.f32.mxu0 0.0
    %134 = vmatmul.mubr.f32.gmra.mrb[0].mxu0 %v55
    %v135 = vpop.f32.mrb[0].mxu0
    %v136 = vadd.f32 %v36, %v135
    %v137 = vpop.f32.mrb[0].mxu0
    %138 = vmatprep.mubr.f32.mxu0 0.0
    %139 = vmatmul.mubr.f32.gmra.mrb[0].mxu0 %v58
    %v140 = vpop.f32.mrb[0].mxu0
    %v141 = vadd.f32 %v41, %v140
    %v142 = vpop.f32.mrb[0].mxu0
    %143 = vmatprep.mubr.f32.mxu0 0.0
    %144 = vmatmul.mubr.f32.gmra.mrb[0].mxu0 %v61
    %v145 = vpop.f32.mrb[0].mxu0
    %v146 = vadd.f32 %v46, %v145
    %v147 = vpop.f32.mrb[0].mxu0
    %148 = vmatprep.mubr.f32.mxu0 0.0
    %149 = vmatmul.mubr.f32.gmra.mrb[0].mxu0 %v64
    %v150 = vpop.f32.mrb[0].mxu0
    %v151 = vadd.f32 %v51, %v150
    %v152 = vpop.f32.mrb[0].mxu0
    %153 = vdwg.mxu0
    %v154 = vmax.f32 %v136, 0.0
    %v155 = vmax.f32 %v141, 0.0
    %v156 = vmax.f32 %v146, 0.0
    %v157 = vmax.f32 %v151, 0.0
    %v158 = vld [vmem:[%s2] sm:$0xff]
    %v159 = vld [vmem:[%s2 + $0x8] sm:$0xff]
    %161 = vset.pattern.permute.xlu0 0
    %162 = vperm.xlu0 %161, %v26
    %v163 = vpop.permute.xlu0 %162
    %166 = vset.pattern.permute.xlu0 0
    %167 = vperm.xlu0 %166, %v27
    %v168 = vpop.permute.xlu0 %167
    %vm170 = vcmask 261120
    %v172 = vsel %vm170, %v158, 0
    %v175 = vsel %vm170, %v159, 0
    %177 = vmatprep.subr.mxu0 0.0
    %178 = vmatpush1.msra.mxu0 %v154
    %179 = vmatprep.subr.mxu0 0.0
    %180 = vmatpush1.msra.mxu0 %v155
    %181 = vmatprep.subr.mxu0 0.0
    %182 = vmatpush1.msra.mxu0 %v156
    %183 = vmatprep.subr.mxu0 0.0
    %184 = vmatpush1.msra.mxu0 %v157
    %185 = vmatprep.subr.mxu0 0.0
    %186 = vmatpush1.msra.mxu0 0.0
    %187 = vmatprep.subr.mxu0 0.0
    %188 = vmatpush1.msra.mxu0 0.0
    %189 = vmatprep.subr.mxu0 0.0
    %190 = vmatpush1.msra.mxu0 0.0
    %191 = vmatprep.subr.mxu0 0.0
    %192 = vmatpush1.msra.mxu0 0.0
    %193 = vmatprep.subr.mxu0 0.0
    %194 = vmatpush1.msra.mxu0 0.0
    %195 = vmatprep.subr.mxu0 0.0
    %196 = vmatpush1.msra.mxu0 0.0
    %197 = vmatprep.subr.mxu0 0.0
    %198 = vmatpush1.msra.mxu0 0.0
    %199 = vmatprep.subr.mxu0 0.0
    %200 = vmatpush1.msra.mxu0 0.0
    %201 = vmatprep.subr.mxu0 0.0
    %202 = vmatpush1.msra.mxu0 0.0
    %203 = vmatprep.subr.mxu0 0.0
    %204 = vmatpush1.msra.mxu0 0.0
    %205 = vmatprep.subr.mxu0 0.0
    %206 = vmatpush1.msra.mxu0 0.0
    %207 = vmatprep.subr.mxu0 0.0
    %208 = vmatpush1.msra.mxu0 0.0
    %209 = vmatprep.subr.mxu0 0.0
    %210 = vmatpush1.msra.mxu0 0.0
    %211 = vmatprep.subr.mxu0 0.0
    %212 = vmatpush1.msra.mxu0 0.0
    %213 = vmatprep.subr.mxu0 0.0
    %214 = vmatpush1.msra.mxu0 0.0
    %215 = vmatprep.subr.mxu0 0.0
    %216 = vmatpush1.msra.mxu0 0.0
    %217 = vmatprep.subr.mxu0 0.0
    %218 = vmatpush1.msra.mxu0 0.0
    %219 = vmatprep.subr.mxu0 0.0
    %220 = vmatpush1.msra.mxu0 0.0
    %221 = vmatprep.subr.mxu0 0.0
    %222 = vmatpush1.msra.mxu0 0.0
    %223 = vmatprep.subr.mxu0 0.0
    %224 = vmatpush1.msra.mxu0 0.0
    %225 = vmatprep.subr.mxu0 0.0
    %226 = vmatpush1.msra.mxu0 0.0
    %227 = vmatprep.subr.mxu0 0.0
    %228 = vmatpush1.msra.mxu0 0.0
    %229 = vmatprep.subr.mxu0 0.0
    %230 = vmatpush1.msra.mxu0 0.0
    %231 = vmatprep.subr.mxu0 0.0
    %232 = vmatpush1.msra.mxu0 0.0
    %233 = vmatprep.subr.mxu0 0.0
    %234 = vmatpush1.msra.mxu0 0.0
    %235 = vmatprep.subr.mxu0 0.0
    %236 = vmatpush1.msra.mxu0 0.0
    %237 = vmatprep.subr.mxu0 0.0
    %238 = vmatpush1.msra.mxu0 0.0
    %239 = vmatprep.subr.mxu0 0.0
    %240 = vmatpush1.msra.mxu0 0.0
    %241 = vmatprep.mubr.f32.mxu0 0.0
    %242 = vmatmul.mubr.f32.gmra.mrb[0].mxu0 %v172
    %v243 = vpop.f32.mrb[0].mxu0
    %v244 = vadd.f32 %v163, %v243
    %v245 = vpop.f32.mrb[0].mxu0
    %246 = vmatprep.mubr.f32.mxu0 0.0
    %247 = vmatmul.mubr.f32.gmra.mrb[0].mxu0 %v175
    %v248 = vpop.f32.mrb[0].mxu0
    %v249 = vadd.f32 %v168, %v248
    %v250 = vpop.f32.mrb[0].mxu0
    %251 = vdwg.mxu0
    %v252 = vmax.f32 %v244, 0.0
    %v253 = vmax.f32 %v249, 0.0
    %v254 = vld [vmem:[%s3] sm:$0x3]
    %256 = vset.pattern.permute.xlu0 0
    %257 = vperm.xlu0 %256, %v28
    %v258 = vpop.permute.xlu0 %257
    %vm260 = vcmask 130048
    %v262 = vsel %vm260, %v254, 0
    %264 = vmatprep.subr.mxu0 0.0
    %265 = vmatpush1.msra.mxu0 %v252
    %266 = vmatprep.subr.mxu0 0.0
    %267 = vmatpush1.msra.mxu0 %v253
    %268 = vmatprep.subr.mxu0 0.0
    %269 = vmatpush1.msra.mxu0 0.0
    %270 = vmatprep.subr.mxu0 0.0
    %271 = vmatpush1.msra.mxu0 0.0
    %272 = vmatprep.subr.mxu0 0.0
    %273 = vmatpush1.msra.mxu0 0.0
    %274 = vmatprep.subr.mxu0 0.0
    %275 = vmatpush1.msra.mxu0 0.0
    %276 = vmatprep.subr.mxu0 0.0
    %277 = vmatpush1.msra.mxu0 0.0
    %278 = vmatprep.subr.mxu0 0.0
    %279 = vmatpush1.msra.mxu0 0.0
    %280 = vmatprep.subr.mxu0 0.0
    %281 = vmatpush1.msra.mxu0 0.0
    %282 = vmatprep.subr.mxu0 0.0
    %283 = vmatpush1.msra.mxu0 0.0
    %284 = vmatprep.subr.mxu0 0.0
    %285 = vmatpush1.msra.mxu0 0.0
    %286 = vmatprep.subr.mxu0 0.0
    %287 = vmatpush1.msra.mxu0 0.0
    %288 = vmatprep.subr.mxu0 0.0
    %289 = vmatpush1.msra.mxu0 0.0
    %290 = vmatprep.subr.mxu0 0.0
    %291 = vmatpush1.msra.mxu0 0.0
    %292 = vmatprep.subr.mxu0 0.0
    %293 = vmatpush1.msra.mxu0 0.0
    %294 = vmatprep.subr.mxu0 0.0
    %295 = vmatpush1.msra.mxu0 0.0
    %296 = vmatprep.subr.mxu0 0.0
    %297 = vmatpush1.msra.mxu0 0.0
    %298 = vmatprep.subr.mxu0 0.0
    %299 = vmatpush1.msra.mxu0 0.0
    %300 = vmatprep.subr.mxu0 0.0
    %301 = vmatpush1.msra.mxu0 0.0
    %302 = vmatprep.subr.mxu0 0.0
    %303 = vmatpush1.msra.mxu0 0.0
    %304 = vmatprep.subr.mxu0 0.0
    %305 = vmatpush1.msra.mxu0 0.0
    %306 = vmatprep.subr.mxu0 0.0
    %307 = vmatpush1.msra.mxu0 0.0
    %308 = vmatprep.subr.mxu0 0.0
    %309 = vmatpush1.msra.mxu0 0.0
    %310 = vmatprep.subr.mxu0 0.0
    %311 = vmatpush1.msra.mxu0 0.0
    %312 = vmatprep.subr.mxu0 0.0
    %313 = vmatpush1.msra.mxu0 0.0
    %314 = vmatprep.subr.mxu0 0.0
    %315 = vmatpush1.msra.mxu0 0.0
    %316 = vmatprep.subr.mxu0 0.0
    %317 = vmatpush1.msra.mxu0 0.0
    %318 = vmatprep.subr.mxu0 0.0
    %319 = vmatpush1.msra.mxu0 0.0
    %320 = vmatprep.subr.mxu0 0.0
    %321 = vmatpush1.msra.mxu0 0.0
    %322 = vmatprep.subr.mxu0 0.0
    %323 = vmatpush1.msra.mxu0 0.0
    %324 = vmatprep.subr.mxu0 0.0
    %325 = vmatpush1.msra.mxu0 0.0
    %326 = vmatprep.subr.mxu0 0.0
    %327 = vmatpush1.msra.mxu0 0.0
    %328 = vmatprep.mubr.f32.mxu0 0.0
    %329 = vmatmul.mubr.f32.gmra.mrb[0].mxu0 %v262
    %v330 = vpop.f32.mrb[0].mxu0
    %v331 = vadd.f32 %v258, %v330
    %v332 = vpop.f32.mrb[0].mxu0
    %333 = vdwg.mxu0
    %vm334 = vcmask 58368
    %335 = vst.msk [vmem:[#allocation2] sm:$0x3] %vm334, %v331
    // Predicated region
    $region22: #{tpu_custom_call.1} parent=1 // pred_check
      _
    $region23: #{tpu_custom_call.1} parent=1 // pred_check_branch
      %337 = sbr.rel (0) target = $region25
    $region24: #{tpu_custom_call.1} parent=1 // pred_region
      %s339 = ssub.s32 32, 32
      %340 = vsyncadd [#allocation3], %s339
      %s342 = sshll.u32 [#allocation2], 4
      %s343 = int_to_ptr.vmem [resolvable:$true] %s342
      %345 = dma.vmem_to_hbm [thread:$0]  %s343, 32, %s5, [#allocation3]
    $region25: #{tpu_custom_call.1} parent=1 // pred_fallthru
      _
    // Predicated region
    $region26: #{tpu_custom_call.1} parent=1 // pred_check
      _
    $region27: #{tpu_custom_call.1} parent=1 // pred_check_branch
      %347 = sbr.rel (0) target = $region29
    $region28: #{tpu_custom_call.1} parent=1 // pred_region
      %348 = dma.done [#allocation3], 32
    $region29: #{tpu_custom_call.1} parent=1 // pred_fallthru
      _
    %349 = vsyncpa [#allocation3], 1

</llo_original>
